<compile_context>
chip_gen: v5e
topology: v5e:2x2
jax: 0.10.0
libtpu: 0.0.40
codegen_flags: <defaults>
</compile_context>

<pallas_src>
import functools

import jax
import jax.numpy as jnp
from jax.experimental import pallas as pl
from jax.experimental.pallas import tpu as pltpu


def _round_up(x, m):
    return (x + m - 1) // m * m


def _glu_kernel(x0_ref, x1_ref, w_ref, b_ref, o_ref, *,
                kernel_size, dilation, tile_l, od_pad):
    # x0_ref: (1, c_pad, tile_l)      current column tile (compute dtype)
    # x1_ref: (1, c_pad, halo_pad)    halo columns just past this tile
    # w_ref : (K, 2*od_pad, c_pad)    per-tap weights, rows [:od_pad]=base, [od_pad:]=gate
    # b_ref : (2*od_pad, 1)           f32 bias
    # o_ref : (1, od_pad, tile_l)
    x0 = x0_ref[0]
    xx = jnp.concatenate([x0, x1_ref[0]], axis=-1)   # (c_pad, tile_l + halo_pad)

    # Tap 0 is lane-aligned; remaining taps are static (small) lane offsets.
    acc = jnp.dot(w_ref[0], x0, preferred_element_type=jnp.float32)
    for k in range(1, kernel_size):
        tap = xx[:, k * dilation:k * dilation + tile_l]
        acc = acc + jnp.dot(w_ref[k], tap, preferred_element_type=jnp.float32)

    acc = acc + b_ref[...]                 # f32 bias add (broadcast along lanes)
    base = acc[:od_pad]                    # sublane-aligned row split
    gate = acc[od_pad:]
    o_ref[0] = (base * jax.nn.sigmoid(gate)).astype(o_ref.dtype)


def glu_forward(x, weight, bias, *, kernel_size, dilation, out_dim,
                compute_dtype=jnp.bfloat16, out_dtype=None):
    """x: (N, C_in, L) ; weight: (2*out_dim, C_in, K) ; bias: (2*out_dim,)."""
    n, c_in, length = x.shape
    halo = dilation * (kernel_size - 1)
    l_out = length - halo
    assert l_out > 0, "input length too small for kernel/dilation"
    out_dtype = x.dtype if out_dtype is None else out_dtype

    c_pad = _round_up(c_in, 8)
    od_pad = _round_up(out_dim, 8)
    halo_pad = _round_up(max(halo, 1), 128)        # lane extent of the halo block
    lp = _round_up(l_out, halo_pad)                # padded output length (waste < halo_pad)

    # Lane-tile selection: multiple of halo_pad, divides lp, capped by 2048 and a
    # conservative double-buffered VMEM budget (portable to v7x's 64 MiB VMEM).
    comp_isz = jnp.dtype(compute_dtype).itemsize
    out_isz = jnp.dtype(out_dtype).itemsize
    per_col_bytes = 2 * (c_pad * comp_isz + od_pad * out_isz)   # double-buffered
    vmem_budget = 8 * 1024 * 1024
    cap = min(2048, vmem_budget // max(per_col_bytes, 1))
    cap = max(halo_pad, (cap // halo_pad) * halo_pad)
    tile_l = halo_pad
    t = halo_pad
    while t <= min(lp, cap):
        if lp % t == 0:
            tile_l = t
        t += halo_pad

    # Pad input: channels -> c_pad, length -> lp + halo_pad (zeros), cast to bf16.
    lxp = lp + halo_pad
    xc = jnp.pad(x.astype(compute_dtype),
                 ((0, 0), (0, c_pad - c_in), (0, lxp - length)))

    # weight (2*out_dim, C_in, K) -> (K, 2*od_pad, c_pad); rows [:od_pad]=base, [od_pad:]=gate.
    wb = jnp.pad(weight[:out_dim], ((0, od_pad - out_dim), (0, c_pad - c_in), (0, 0)))
    wg = jnp.pad(weight[out_dim:], ((0, od_pad - out_dim), (0, c_pad - c_in), (0, 0)))
    w = jnp.transpose(jnp.concatenate([wb, wg], axis=0), (2, 0, 1)).astype(compute_dtype)

    b = jnp.concatenate([
        jnp.pad(bias[:out_dim], (0, od_pad - out_dim)),
        jnp.pad(bias[out_dim:], (0, od_pad - out_dim)),
    ]).reshape(2 * od_pad, 1).astype(jnp.float32)

    num_tiles = lp // tile_l
    grid = (n, num_tiles)
    halo_blk = tile_l // halo_pad      # x1 block-index stride per column tile

    kern = functools.partial(_glu_kernel, kernel_size=kernel_size,
                             dilation=dilation, tile_l=tile_l, od_pad=od_pad)

    flops = 2 * kernel_size * (2 * od_pad) * c_pad * n * lp + 4 * od_pad * n * lp
    bytes_accessed = (n * num_tiles * c_pad * (tile_l + halo_pad) * comp_isz
                      + w.size * comp_isz + b.size * 4
                      + n * od_pad * lp * out_isz)

    out = pl.pallas_call(
        kern,
        out_shape=jax.ShapeDtypeStruct((n, od_pad, lp), out_dtype),
        grid_spec=pltpu.PrefetchScalarGridSpec(
            num_scalar_prefetch=0,
            grid=grid,
            in_specs=[
                pl.BlockSpec((1, c_pad, tile_l), lambda b_, j: (b_, 0, j)),
                pl.BlockSpec((1, c_pad, halo_pad),
                             lambda b_, j: (b_, 0, (j + 1) * halo_blk)),
                pl.BlockSpec((kernel_size, 2 * od_pad, c_pad),
                             lambda b_, j: (0, 0, 0)),
                pl.BlockSpec((2 * od_pad, 1), lambda b_, j: (0, 0)),
            ],
            out_specs=pl.BlockSpec((1, od_pad, tile_l),
                                   lambda b_, j: (b_, 0, j)),
        ),
        compiler_params=pltpu.CompilerParams(
            dimension_semantics=("parallel", "parallel")),
        cost_estimate=pl.CostEstimate(
            flops=flops,
            transcendentals=2 * od_pad * n * lp,
            bytes_accessed=bytes_accessed),
    )(xc, xc, w, b)

    # Direct (N, out_dim, L) layout: only a cheap slice, no transpose round trip.
    return out[:, :out_dim, :l_out]


def glu_reference(x, weight, bias, *, dilation, out_dim):
    """Pure-JAX reference (lax conv) matching torch.nn.Conv1d semantics."""
    y = jax.lax.conv_general_dilated(
        x, weight, window_strides=(1,), padding="VALID",
        rhs_dilation=(dilation,),
        dimension_numbers=("NCH", "OIH", "NCH"),
    ) + bias.reshape(1, -1, 1)
    base = y[:, :out_dim]
    gate = y[:, out_dim:]
    return base * jax.nn.sigmoid(gate)


if __name__ == "__main__":
    # Module hyper-params (mirrors GLU(in_dim, out_dim, kernel_size, dilation))
    in_dim, out_dim, kernel_size, dilation = 8, 8, 3, 2
    batch, length = 2, 32

    key = jax.random.PRNGKey(0)
    kx, kw, kb = jax.random.split(key, 3)

    x = jax.random.normal(kx, (batch, in_dim, length), dtype=jnp.float32)
    # Deterministic synthetic Conv1d parameters (torch-like uniform init scale).
    fan_in = in_dim * kernel_size
    bound = 1.0 / jnp.sqrt(fan_in)
    weight = jax.random.uniform(
        kw, (2 * out_dim, in_dim, kernel_size), minval=-bound, maxval=bound,
        dtype=jnp.float32)
    bias = jax.random.uniform(
        kb, (2 * out_dim,), minval=-bound, maxval=bound, dtype=jnp.float32)

    out = glu_forward(
        x, weight, bias,
        kernel_size=kernel_size, dilation=dilation, out_dim=out_dim)
    out = jax.block_until_ready(out)

    ref = glu_reference(x, weight, bias, dilation=dilation, out_dim=out_dim)
    l_out = length - dilation * (kernel_size - 1)
    assert out.shape == ref.shape == (batch, out_dim, l_out)
    # bf16 MXU operands (f32 accumulation) -> loosened tolerance vs f32 reference.
    assert jnp.allclose(out, ref, atol=3e-2, rtol=3e-2), "mismatch vs reference"

    print("KERNEL_OK")
</pallas_src>

<mosaic_0001>
module attributes {stable_mosaic.version = 11 : i64} {
  func.func @_glu_kernel(%arg0: i32, %arg1: i32, %arg2: memref<1x8x128xbf16, #tpu.memory_space<vmem>>, %arg3: memref<1x8x128xbf16, #tpu.memory_space<vmem>>, %arg4: memref<3x16x8xbf16, #tpu.memory_space<vmem>>, %arg5: memref<16x1xf32, #tpu.memory_space<vmem>>, %arg6: memref<1x8x128xf32, #tpu.memory_space<vmem>>) attributes {dimension_semantics = [#tpu.dimension_semantics<parallel>, #tpu.dimension_semantics<parallel>], iteration_bounds = array<i64: 2, 1>, scalar_prefetch = 0 : i64, scratch_operands = 0 : i64, tpu.core_type = #tpu.core_type<tc>, window_params = [{transform_indices = @transform_0, window_bounds = array<i64: 1, 8, 128>}, {transform_indices = @transform_1, window_bounds = array<i64: 1, 8, 128>}, {pipeline_mode = #tpu.pipeline_mode<synchronous>, transform_indices = @transform_2, window_bounds = array<i64: 3, 16, 8>}, {pipeline_mode = #tpu.pipeline_mode<synchronous>, transform_indices = @transform_3, window_bounds = array<i64: 16, 1>}, {transform_indices = @transform_4, window_bounds = array<i64: 1, 8, 128>}]} {
    %c0 = arith.constant 0 : index
    %c0_0 = arith.constant 0 : index
    %c0_1 = arith.constant 0 : index
    %0 = vector.load %arg2[%c0, %c0_0, %c0_1] : memref<1x8x128xbf16, #tpu.memory_space<vmem>>, vector<1x8x128xbf16>
    %1 = vector.shape_cast %0 : vector<1x8x128xbf16> to vector<8x128xbf16>
    %c0_2 = arith.constant 0 : index
    %c0_3 = arith.constant 0 : index
    %c0_4 = arith.constant 0 : index
    %2 = vector.load %arg3[%c0_2, %c0_3, %c0_4] : memref<1x8x128xbf16, #tpu.memory_space<vmem>>, vector<1x8x128xbf16>
    %3 = vector.shape_cast %2 : vector<1x8x128xbf16> to vector<8x128xbf16>
    %4 = tpu.concatenate %1, %3 in 1 : vector<8x128xbf16>, vector<8x128xbf16> -> vector<8x256xbf16>
    %c0_5 = arith.constant 0 : index
    %c0_6 = arith.constant 0 : index
    %c0_7 = arith.constant 0 : index
    %5 = vector.load %arg4[%c0_5, %c0_6, %c0_7] : memref<3x16x8xbf16, #tpu.memory_space<vmem>>, vector<1x16x8xbf16>
    %6 = vector.shape_cast %5 : vector<1x16x8xbf16> to vector<16x8xbf16>
    %cst = arith.constant dense<0.000000e+00> : vector<16x128xf32>
    %7 = tpu.matmul %6, %1, %cst {dimension_numbers = #tpu.dot_dimension_numbers<[1], [0], [0], [1], [0, 0, 1, 1], [], []>} : vector<16x8xbf16>, vector<8x128xbf16>, vector<16x128xf32> -> vector<16x128xf32>
    %8 = vector.extract_strided_slice %4 {offsets = [0, 2], sizes = [8, 128], strides = [1, 1]} : vector<8x256xbf16> to vector<8x128xbf16>
    %c1 = arith.constant 1 : index
    %c0_8 = arith.constant 0 : index
    %c0_9 = arith.constant 0 : index
    %9 = vector.load %arg4[%c1, %c0_8, %c0_9] : memref<3x16x8xbf16, #tpu.memory_space<vmem>>, vector<1x16x8xbf16>
    %10 = vector.shape_cast %9 : vector<1x16x8xbf16> to vector<16x8xbf16>
    %cst_10 = arith.constant dense<0.000000e+00> : vector<16x128xf32>
    %11 = tpu.matmul %10, %8, %cst_10 {dimension_numbers = #tpu.dot_dimension_numbers<[1], [0], [0], [1], [0, 0, 1, 1], [], []>} : vector<16x8xbf16>, vector<8x128xbf16>, vector<16x128xf32> -> vector<16x128xf32>
    %12 = arith.addf %7, %11 : vector<16x128xf32>
    %13 = vector.extract_strided_slice %4 {offsets = [0, 4], sizes = [8, 128], strides = [1, 1]} : vector<8x256xbf16> to vector<8x128xbf16>
    %c2 = arith.constant 2 : index
    %c0_11 = arith.constant 0 : index
    %c0_12 = arith.constant 0 : index
    %14 = vector.load %arg4[%c2, %c0_11, %c0_12] : memref<3x16x8xbf16, #tpu.memory_space<vmem>>, vector<1x16x8xbf16>
    %15 = vector.shape_cast %14 : vector<1x16x8xbf16> to vector<16x8xbf16>
    %cst_13 = arith.constant dense<0.000000e+00> : vector<16x128xf32>
    %16 = tpu.matmul %15, %13, %cst_13 {dimension_numbers = #tpu.dot_dimension_numbers<[1], [0], [0], [1], [0, 0, 1, 1], [], []>} : vector<16x8xbf16>, vector<8x128xbf16>, vector<16x128xf32> -> vector<16x128xf32>
    %17 = arith.addf %12, %16 : vector<16x128xf32>
    %c0_14 = arith.constant 0 : index
    %c0_15 = arith.constant 0 : index
    %18 = vector.load %arg5[%c0_14, %c0_15] : memref<16x1xf32, #tpu.memory_space<vmem>>, vector<16x1xf32>
    %19 = vector.broadcast %18 : vector<16x1xf32> to vector<16x128xf32>
    %20 = arith.addf %17, %19 : vector<16x128xf32>
    %21 = vector.extract_strided_slice %20 {offsets = [0, 0], sizes = [8, 128], strides = [1, 1]} : vector<16x128xf32> to vector<8x128xf32>
    %22 = vector.extract_strided_slice %20 {offsets = [8, 0], sizes = [8, 128], strides = [1, 1]} : vector<16x128xf32> to vector<8x128xf32>
    %23 = arith.negf %22 : vector<8x128xf32>
    %24 = math.exp %23 : vector<8x128xf32>
    %cst_16 = arith.constant 1.000000e+00 : f32
    %25 = vector.broadcast %cst_16 : f32 to vector<8x128xf32>
    %26 = arith.addf %25, %24 : vector<8x128xf32>
    %27 = arith.divf %25, %26 : vector<8x128xf32>
    %28 = arith.mulf %21, %27 : vector<8x128xf32>
    %c0_17 = arith.constant 0 : index
    %c0_18 = arith.constant 0 : index
    %c0_19 = arith.constant 0 : index
    %29 = vector.load %arg6[%c0_17, %c0_18, %c0_19] : memref<1x8x128xf32, #tpu.memory_space<vmem>>, vector<1x8x128xf32>
    %30 = vector.shape_cast %29 : vector<1x8x128xf32> to vector<8x128xf32>
    %31 = vector.shape_cast %28 : vector<8x128xf32> to vector<1x8x128xf32>
    tpu.vector_store %arg6[%c0_17, %c0_18, %c0_19], %31 {strides = array<i32>} : memref<1x8x128xf32, #tpu.memory_space<vmem>>, vector<1x8x128xf32>,
    return
  }
  func.func @transform_0(%arg0: i32, %arg1: i32) -> (i32, i32, i32) {
    %c0_i32 = arith.constant 0 : i32
    %c0_i32_0 = arith.constant 0 : i32
    return %arg0, %c0_i32, %arg1 : i32, i32, i32
  }
  func.func @transform_1(%arg0: i32, %arg1: i32) -> (i32, i32, i32) {
    %c1_i32 = arith.constant 1 : i32
    %0 = arith.addi %arg1, %c1_i32 : i32
    %c1_i32_0 = arith.constant 1 : i32
    %1 = arith.muli %0, %c1_i32_0 : i32
    %c0_i32 = arith.constant 0 : i32
    %c0_i32_1 = arith.constant 0 : i32
    return %arg0, %c0_i32, %1 : i32, i32, i32
  }
  func.func @transform_2(%arg0: i32, %arg1: i32) -> (i32, i32, i32) {
    %c0_i32 = arith.constant 0 : i32
    %c0_i32_0 = arith.constant 0 : i32
    %c0_i32_1 = arith.constant 0 : i32
    %c0_i32_2 = arith.constant 0 : i32
    return %c0_i32, %c0_i32_0, %c0_i32_1 : i32, i32, i32
  }
  func.func @transform_3(%arg0: i32, %arg1: i32) -> (i32, i32) {
    %c0_i32 = arith.constant 0 : i32
    %c0_i32_0 = arith.constant 0 : i32
    %c0_i32_1 = arith.constant 0 : i32
    return %c0_i32, %c0_i32_0 : i32, i32
  }
  func.func @transform_4(%arg0: i32, %arg1: i32) -> (i32, i32, i32) {
    %c0_i32 = arith.constant 0 : i32
    %c0_i32_0 = arith.constant 0 : i32
    return %arg0, %c0_i32, %arg1 : i32, i32, i32
  }
}

</mosaic_0001>

<llo_original>
// kernel: tpu_custom_call.1
$region0: #{tpu_custom_call.1}
  #allocation0 [shape = 'u32[]', space=smem, size = 0x4, offset = 0x4, fixed_abs, tag = 'smem constant byte address 0x4 - core index']
  #allocation1 [shape = 'u32[72,128]{1,0:T(1,128)}', space=vmem, size = 0x9000, scoped, tag = 'internal scratch']
  %s0 = inlined_call_operand.vmem [shape: bf16[2,8,256], index: 0, kind: input, shape index: {}]
  %s1 = inlined_call_operand.vmem [shape: bf16[2,8,256], index: 1, kind: input, shape index: {}]
  %s2 = inlined_call_operand.vmem [shape: bf16[3,16,8], index: 2, kind: input, shape index: {}]
  %s3 = inlined_call_operand.vmem [shape: f32[16,1], index: 3, kind: input, shape index: {}]
  %s4 = inlined_call_operand.hbm [shape: f32[2,8,128], index: 4, kind: output, shape index: {}]
  %s5 = sld [smem:[#allocation0]]
  $region49: #{tpu_custom_call.1} parent=0
    _
  %s7 = ssub.s32 1, %s5
  %s8 = scalar_select 0, %s7, %s5
  $region1: #{tpu_custom_call.1} parent=0
    #allocation2 [shape = 'u8[8192]{0}', space=vmem, size = 0x2000, scoped, tag = 'output window, operand 0']
    #allocation3 [shape = 's32[2]{0}', space=sflag, size = 0x8, scoped, tag = 'scoped memory for tpu_custom_call.1']
    %9 = vsyncpa [#allocation3], 0
    %s10 = scalar_lea.sflag [#allocation3], 1
    %11 = vsyncpa %s10, 0
    loop: start=0, step=1, limit=4
    $region2: #{tpu_custom_call.1} parent=1 // loop_pre_header
      _
    $region3: #{tpu_custom_call.1} parent=1 // loop_header
      %s13 = sphi 0, %s17
      %p14 = scmp.ge.s32.totalorder %s13, 4
      %s20 = sphi 0, %s32
      %s21 = sphi 0, %s28
      %s22 = sphi 0, %s20
      %s23 = sphi 0, %s21
      %s24 = sphi 0, %s22
      %s25 = sphi 0, %s23
      %s37 = sphi 0, %s39
      %s40 = sphi 0, %s37
      %s41 = sphi 0, %s40
      %s57 = sphi 0, %s41
      %s67 = sphi 0, %s69
      %s70 = sphi 0, %s67
      %s71 = sphi 0, %s70
      %s87 = sphi 0, %s71
      %s91 = sphi 0, %s91
      %s93 = sphi 0, %s91
      %s94 = sphi 0, %s93
      %s108 = sphi 0, %s94
      %s112 = sphi 0, %s112
      %s114 = sphi 0, %s112
      %s115 = sphi 0, %s114
      %s129 = sphi 0, %s115
      %s137 = sphi 0, %s139
      %s140 = sphi 0, %s137
      %s141 = sphi 0, %s140
      %s157 = sphi 0, %s141
    $region4: #{tpu_custom_call.1} parent=1 // loop_header_branch
      %16 = sbr.rel (%p14) target = $region8
    $region5: #{tpu_custom_call.1} parent=1 // loop_body
      %s18 = ssub.s32 %s13, 1
      %s19 = ssub.s32 %s13, 2
      %s26 = sadd.s32 1, %s21
      %p27 = scmp.ge.s32.totalorder %s26, 1
      %s28 = scalar_select %p27, 0, %s26
      %s29 = sadd.s32 1, %s20
      %s30 = scalar_select %p27, %s29, %s20
      %p31 = scmp.ge.s32.totalorder %s30, 2
      %s32 = scalar_select %p31, 0, %s30
      %s33 = ssub.s32 %s20, %s32
      %s34 = ssub.s32 %s21, %s28
      %s35 = sor.u32 %s33, %s34
      %p36 = scmp.eq.s32.totalorder %s35, 0
      %s38 = sadd.s32 %s37, 1
      %s39 = scalar_select %p36, %s37, %s38
      %p42 = pneg %p36
      %p43 = scmp.eq.s32.totalorder %s13, 1
      %p44 = por %p42, %p43
      %p45 = scmp.ne.s32.totalorder %s37, %s40
      %p46 = scmp.eq.s32.totalorder %s13, 0
      %p47 = por %p45, %p46
      %p48 = scmp.ne.s32.totalorder %s37, %s40
      %p49 = scmp.eq.s32.totalorder %s18, 1
      %p50 = por %p48, %p49
      %p51 = scmp.ne.s32.totalorder %s40, %s41
      %p52 = scmp.eq.s32.totalorder %s18, 0
      %p53 = por %p51, %p52
      %p54 = scmp.ne.s32.totalorder %s40, %s41
      %p55 = scmp.eq.s32.totalorder %s19, 1
      %p56 = por %p54, %p55
      %p58 = scmp.ne.s32.totalorder %s41, %s57
      %p59 = scmp.eq.s32.totalorder %s19, 0
      %p60 = por %p58, %p59
      %s61 = sadd.s32 %s21, 1
      %s62 = sadd.s32 %s28, 1
      %s63 = ssub.s32 %s20, %s32
      %s64 = ssub.s32 %s61, %s62
      %s65 = sor.u32 %s63, %s64
      %p66 = scmp.eq.s32.totalorder %s65, 0
      %s68 = sadd.s32 %s67, 1
      %s69 = scalar_select %p66, %s67, %s68
      %p72 = pneg %p66
      %p73 = scmp.eq.s32.totalorder %s13, 1
      %p74 = por %p72, %p73
      %p75 = scmp.ne.s32.totalorder %s67, %s70
      %p76 = scmp.eq.s32.totalorder %s13, 0
      %p77 = por %p75, %p76
      %p78 = scmp.ne.s32.totalorder %s67, %s70
      %p79 = scmp.eq.s32.totalorder %s18, 1
      %p80 = por %p78, %p79
      %p81 = scmp.ne.s32.totalorder %s70, %s71
      %p82 = scmp.eq.s32.totalorder %s18, 0
      %p83 = por %p81, %p82
      %p84 = scmp.ne.s32.totalorder %s70, %s71
      %p85 = scmp.eq.s32.totalorder %s19, 1
      %p86 = por %p84, %p85
      %p88 = scmp.ne.s32.totalorder %s71, %s87
      %p89 = scmp.eq.s32.totalorder %s19, 0
      %p90 = por %p88, %p89
      %s92 = sadd.s32 %s91, 1
      %p95 = scmp.eq.s32.totalorder %s13, 1
      %p96 = scmp.ne.s32.totalorder %s91, %s93
      %p97 = scmp.eq.s32.totalorder %s13, 0
      %p98 = por %p96, %p97
      %p99 = scmp.ne.s32.totalorder %s91, %s93
      %p100 = scmp.eq.s32.totalorder %s18, 1
      %p101 = por %p99, %p100
      %p102 = scmp.ne.s32.totalorder %s93, %s94
      %p103 = scmp.eq.s32.totalorder %s18, 0
      %p104 = por %p102, %p103
      %p105 = scmp.ne.s32.totalorder %s93, %s94
      %p106 = scmp.eq.s32.totalorder %s19, 1
      %p107 = por %p105, %p106
      %p109 = scmp.ne.s32.totalorder %s94, %s108
      %p110 = scmp.eq.s32.totalorder %s19, 0
      %p111 = por %p109, %p110
      %s113 = sadd.s32 %s112, 1
      %p116 = scmp.eq.s32.totalorder %s13, 1
      %p117 = scmp.ne.s32.totalorder %s112, %s114
      %p118 = scmp.eq.s32.totalorder %s13, 0
      %p119 = por %p117, %p118
      %p120 = scmp.ne.s32.totalorder %s112, %s114
      %p121 = scmp.eq.s32.totalorder %s18, 1
      %p122 = por %p120, %p121
      %p123 = scmp.ne.s32.totalorder %s114, %s115
      %p124 = scmp.eq.s32.totalorder %s18, 0
      %p125 = por %p123, %p124
      %p126 = scmp.ne.s32.totalorder %s114, %s115
      %p127 = scmp.eq.s32.totalorder %s19, 1
      %p128 = por %p126, %p127
      %p130 = scmp.ne.s32.totalorder %s115, %s129
      %p131 = scmp.eq.s32.totalorder %s19, 0
      %p132 = por %p130, %p131
      %s133 = ssub.s32 %s20, %s32
      %s134 = ssub.s32 %s21, %s28
      %s135 = sor.u32 %s133, %s134
      %p136 = scmp.eq.s32.totalorder %s135, 0
      %s138 = sadd.s32 %s137, 1
      %s139 = scalar_select %p136, %s137, %s138
      %p142 = pneg %p136
      %p143 = scmp.eq.s32.totalorder %s13, 1
      %p144 = por %p142, %p143
      %p145 = scmp.ne.s32.totalorder %s137, %s140
      %p146 = scmp.eq.s32.totalorder %s13, 0
      %p147 = por %p145, %p146
      %p148 = scmp.ne.s32.totalorder %s137, %s140
      %p149 = scmp.eq.s32.totalorder %s18, 1
      %p150 = por %p148, %p149
      %p151 = scmp.ne.s32.totalorder %s140, %s141
      %p152 = scmp.eq.s32.totalorder %s18, 0
      %p153 = por %p151, %p152
      %p154 = scmp.ne.s32.totalorder %s140, %s141
      %p155 = scmp.eq.s32.totalorder %s19, 1
      %p156 = por %p154, %p155
      %p158 = scmp.ne.s32.totalorder %s141, %s157
      %p159 = scmp.eq.s32.totalorder %s19, 0
      %p160 = por %p158, %p159
      %p161 = scmp.le.s32.totalorder 1, %s13
      %p162 = scmp.lt.s32.totalorder %s13, 3
      %p163 = pnand %p161, %p162
      %p164 = pneg %p163
      // Predicated region
      $region9: #{tpu_custom_call.1} parent=5 // pred_check
        _
      $region10: #{tpu_custom_call.1} parent=5 // pred_check_branch
        %166 = sbr.rel (%p163) target = $region12
      $region11: #{tpu_custom_call.1} parent=5 // pred_region
        %s167 = ssub.s32 %s13, 1
        // Predicated region
        $region13: #{tpu_custom_call.1} parent=11 // pred_check
          %p168 = pneg %p104
        $region14: #{tpu_custom_call.1} parent=11 // pred_check_branch
          %170 = sbr.rel (%p168) target = $region16
        $region15: #{tpu_custom_call.1} parent=11 // pred_region
          _
        $region16: #{tpu_custom_call.1} parent=11 // pred_fallthru
          _
        // Predicated region
        $region17: #{tpu_custom_call.1} parent=11 // pred_check
          %p171 = pneg %p125
        $region18: #{tpu_custom_call.1} parent=11 // pred_check_branch
          %173 = sbr.rel (%p171) target = $region20
        $region19: #{tpu_custom_call.1} parent=11 // pred_region
          _
        $region20: #{tpu_custom_call.1} parent=11 // pred_fallthru
          _
      $region12: #{tpu_custom_call.1} parent=5 // pred_fallthru
        _
      %p174 = scmp.lt.s32.totalorder %s13, 2
      // Predicated region
      $region21: #{tpu_custom_call.1} parent=5 // pred_check
        %p175 = pneg %p174
      $region22: #{tpu_custom_call.1} parent=5 // pred_check_branch
        %177 = sbr.rel (%p175) target = $region24
      $region23: #{tpu_custom_call.1} parent=5 // pred_region
        // Predicated region
        $region25: #{tpu_custom_call.1} parent=23 // pred_check
          %p178 = pneg %p47
        $region26: #{tpu_custom_call.1} parent=23 // pred_check_branch
          %180 = sbr.rel (%p178) target = $region28
        $region27: #{tpu_custom_call.1} parent=23 // pred_region
          %p181 = scmp.lt.s32.totalorder %s20, 1
          %s182 = scalar_select %p181, %s20, 1
          %p183 = scmp.lt.s32.totalorder %s21, 1
          %s184 = scalar_select %p183, %s21, 1
          %s185 = smul.addr %s182, 2
          %s186 = sadd.s32 %s184, %s185
          %s187 = smul.addr %s186, 4
          %s188 = scalar_lea.vmem %s0, %s187
        $region28: #{tpu_custom_call.1} parent=23 // pred_fallthru
          _
        // Predicated region
        $region29: #{tpu_custom_call.1} parent=23 // pred_check
          %p189 = pneg %p77
        $region30: #{tpu_custom_call.1} parent=23 // pred_check_branch
          %191 = sbr.rel (%p189) target = $region32
        $region31: #{tpu_custom_call.1} parent=23 // pred_region
          %s192 = sadd.s32 %s21, 1
          %p193 = scmp.lt.s32.totalorder %s20, 1
          %s194 = scalar_select %p193, %s20, 1
          %p195 = scmp.lt.s32.totalorder %s192, 1
          %s196 = scalar_select %p195, %s192, 1
          %s197 = smul.addr %s194, 2
          %s198 = sadd.s32 %s196, %s197
          %s199 = smul.addr %s198, 4
          %s200 = scalar_lea.vmem %s1, %s199
          %s201 = sadd.s32 %s21, 1
        $region32: #{tpu_custom_call.1} parent=23 // pred_fallthru
          _
      $region24: #{tpu_custom_call.1} parent=5 // pred_fallthru
        _
      %p202 = scmp.le.s32.totalorder 1, %s13
      %p203 = scmp.lt.s32.totalorder %s13, 3
      %p204 = pnand %p202, %p203
      %p205 = pneg %p204
      // Predicated region
      $region33: #{tpu_custom_call.1} parent=5 // pred_check
        _
      $region34: #{tpu_custom_call.1} parent=5 // pred_check_branch
        %207 = sbr.rel (%p204) target = $region36
      $region35: #{tpu_custom_call.1} parent=5 // pred_region
        %s208 = ssub.s32 %s13, 1
        %p209 = scmp.lt.s32.totalorder %s22, 1
        %s210 = scalar_select %p209, %s22, 1
        %p211 = scmp.lt.s32.totalorder %s23, 1
        %s212 = scalar_select %p211, %s23, 1
        %s213 = smul.addr %s210, 2
        %s214 = sadd.s32 %s212, %s213
        %s215 = smul.addr %s214, 4
        %s216 = scalar_lea.vmem %s0, %s215
        %p217 = pneg %p53
        %p218 = pneg %p50
        %s219 = sadd.s32 %s23, 1
        %p220 = scmp.lt.s32.totalorder %s22, 1
        %s221 = scalar_select %p220, %s22, 1
        %p222 = scmp.lt.s32.totalorder %s219, 1
        %s223 = scalar_select %p222, %s219, 1
        %s224 = smul.addr %s221, 2
        %s225 = sadd.s32 %s223, %s224
        %s226 = smul.addr %s225, 4
        %s227 = scalar_lea.vmem %s1, %s226
        %p228 = pneg %p83
        %p229 = pneg %p80
        %p230 = pneg %p104
        %p231 = pneg %p101
        %p232 = pneg %p125
        %p233 = pneg %p122
        %p234 = pneg %p153
        %p235 = pneg %p150
        %s236 = sand.u32 %s140, 1
        %s237 = scalar_lea.sflag [#allocation3], %s236
        %s238 = sand.u32 %s140, 1
        %s239 = smul.addr %s238, 8
        %s240 = scalar_lea.vmem [#allocation2], %s239
        %p241 = scmp.lt.s32.totalorder %s22, 1
        %s242 = scalar_select %p241, %s22, 1
        %p243 = scmp.lt.s32.totalorder %s23, 1
        %s244 = scalar_select %p243, %s23, 1
        %s245 = smul.addr %s242, 2
        %s246 = sadd.s32 %s244, %s245
        %s247 = smul.addr %s246, 4
        %s248 = scalar_lea.vmem %s0, %s247
        %s249 = sadd.s32 %s23, 1
        %p250 = scmp.lt.s32.totalorder %s22, 1
        %s251 = scalar_select %p250, %s22, 1
        %p252 = scmp.lt.s32.totalorder %s249, 1
        %s253 = scalar_select %p252, %s249, 1
        %s254 = smul.addr %s251, 2
        %s255 = sadd.s32 %s253, %s254
        %s256 = smul.addr %s255, 4
        %s257 = scalar_lea.vmem %s1, %s256
        %s258 = sadd.s32 %s23, 1
        %v260 = vld [vmem:[%s248] sm:$0xf]
        %v261 = vld [vmem:[%s257] sm:$0xf]
        %v262 = vld [vmem:[%s2] sm:$0xf]
        %v263 = vld [vmem:[%s2 + $0x4] sm:$0xf]
        %s264 = scalar_lea.vmem %s2, 8
        %v265 = vld [vmem:[%s264] sm:$0xf]
        %v266 = vld [vmem:[%s264 + $0x4] sm:$0xf]
        %v269 = vunpack.c.l.b16 %v265
        %v270 = vunpack.c.l.b16 %v266
        %v271 = vpack.c.b16 %v270, %v269
        %274 = vrot.lane.b32.xlu0 %v260, 126
        %v275 = vpop.permute.xlu0 %274
        %276 = vrot.lane.b32.xlu0 %v261, 126
        %v277 = vpop.permute.xlu0 %276
        %vm278 = vcmask 1031168
        %v279 = vsel %vm278, %v275, %v277
        %vm280 = vcmask 64512
        %v282 = vsel %vm280, %v271, 0
        %vm284 = vcmask 1043456
        %v286 = vsel %vm284, %v279, 0
        %288 = vmatpush.bf16.msra.mxu0 0
        %289 = vmatpush.bf16.msra.mxu0 0
        %290 = vmatpush.bf16.msra.mxu0 0
        %291 = vmatpush.bf16.msra.mxu0 0
        %292 = vmatpush.bf16.msra.mxu0 0
        %293 = vmatpush.bf16.msra.mxu0 0
        %294 = vmatpush.bf16.msra.mxu0 0
        %295 = vmatpush.bf16.msra.mxu0 %v286
        %296 = vmatmul.bf16.gmra.mxu0 %v282
        %v297 = vpop.f32.mrf.mxu0
        %v298 = vadd.f32 0.0, %v297
        %v299 = vpop.f32.mrf.mxu0
        %v300 = vadd.f32 0.0, %v299
        %301 = vdwg.mxu0
        %v304 = vunpack.c.l.b16 %v262
        %v305 = vunpack.c.l.b16 %v263
        %v306 = vpack.c.b16 %v305, %v304
        %v308 = vsel %vm280, %v306, 0
        %v311 = vsel %vm284, %v260, 0
        %313 = vmatpush.bf16.msra.mxu0 0
        %314 = vmatpush.bf16.msra.mxu0 0
        %315 = vmatpush.bf16.msra.mxu0 0
        %316 = vmatpush.bf16.msra.mxu0 0
        %317 = vmatpush.bf16.msra.mxu0 0
        %318 = vmatpush.bf16.msra.mxu0 0
        %319 = vmatpush.bf16.msra.mxu0 0
        %320 = vmatpush.bf16.msra.mxu0 %v311
        %321 = vmatmul.bf16.gmra.mxu0 %v308
        %v322 = vpop.f32.mrf.mxu0
        %v323 = vadd.f32 %v298, %v322
        %v324 = vpop.f32.mrf.mxu0
        %v325 = vadd.f32 %v300, %v324
        %326 = vdwg.mxu0
        %s327 = scalar_lea.vmem %s2, 16
        %v328 = vld [vmem:[%s327] sm:$0xf]
        %v329 = vld [vmem:[%s327 + $0x4] sm:$0xf]
        %v332 = vunpack.c.l.b16 %v328
        %v333 = vunpack.c.l.b16 %v329
        %v334 = vpack.c.b16 %v333, %v332
        %335 = vrot.lane.b32.xlu0 %v260, 124
        %v336 = vpop.permute.xlu0 %335
        %337 = vrot.lane.b32.xlu0 %v261, 124
        %v338 = vpop.permute.xlu0 %337
        %vm339 = vcmask 1014784
        %v340 = vsel %vm339, %v336, %v338
        %v342 = vsel %vm280, %v334, 0
        %v345 = vsel %vm284, %v340, 0
        %347 = vmatpush.bf16.msra.mxu0 0
        %348 = vmatpush.bf16.msra.mxu0 0
        %349 = vmatpush.bf16.msra.mxu0 0
        %350 = vmatpush.bf16.msra.mxu0 0
        %351 = vmatpush.bf16.msra.mxu0 0
        %352 = vmatpush.bf16.msra.mxu0 0
        %353 = vmatpush.bf16.msra.mxu0 0
        %354 = vmatpush.bf16.msra.mxu0 %v345
        %355 = vmatmul.bf16.gmra.mxu0 %v342
        %v356 = vpop.f32.mrf.mxu0
        %v357 = vadd.f32 0.0, %v356
        %v358 = vpop.f32.mrf.mxu0
        %v359 = vadd.f32 0.0, %v358
        %360 = vdwg.mxu0
        %v361 = vadd.f32 %v323, %v357
        %v362 = vadd.f32 %v325, %v359
        %v363 = vld [vmem:[%s3] sm:$0xff]
        %v364 = vld [vmem:[%s3 + $0x8] sm:$0xff]
        %366 = vset.pattern.permute.xlu0 0
        %367 = vperm.xlu0 %366, %v363
        %v368 = vpop.permute.xlu0 %367
        %371 = vset.pattern.permute.xlu0 0
        %372 = vperm.xlu0 %371, %v364
        %v373 = vpop.permute.xlu0 %372
        %v375 = vadd.f32 %v361, %v368
        %v376 = vadd.f32 %v362, %v373
        %v377 = vxor.u32 %v376, 2147483648
        %v378 = vmul.f32 %v377, 1.442695
        %v379 = vpow.pop %v378
        %v380 = vadd.f32 %v379, 1.0
        %v381 = vrcp.pop %v380
        %v382 = vmul.f32 %v380, %v381
        %v383 = vsub.f32 1.0, %v382
        %v384 = vmul.f32 %v381, %v383
        %v385 = vadd.f32 %v381, %v384
        %vm386 = vweird.f32 %v380
        %vm387 = vweird.f32 %v381
        %vm388 = vmor %vm386, %vm387
        %v389 = vsel %vm388, %v381, %v385
        %v390 = vand.u32 2147483647, %v380
        %vm391 = vcmp.eq.f32.partialorder %v390, 8.507059e+37
        %v392 = vand.u32 %v380, 2147483648
        %v393 = vor.u32 1.1754944e-38, %v392
        %v394 = vsel %vm391, %v393, %v389
        %v395 = vmul.f32 1.0, %v394
        %v396 = vmul.f32 %v375, %v395
        %397 = vst [vmem:[%s240] sm:$0xff] %v396
        %s398 = sand.u32 %s140, 1
        %s399 = scalar_lea.sflag [#allocation3], %s398
        %s400 = sand.u32 %s140, 1
        %s401 = smul.addr %s400, 8
        %s402 = scalar_lea.vmem [#allocation2], %s401
        // Predicated region
        $region37: #{tpu_custom_call.1} parent=35 // pred_check
          %p403 = pneg %p150
        $region38: #{tpu_custom_call.1} parent=35 // pred_check_branch
          %405 = sbr.rel (%p403) target = $region40
        $region39: #{tpu_custom_call.1} parent=35 // pred_region
          %407 = vsyncadd %s399, 0
          %s408 = sadd.s32 %s23, %s22
          %s409 = smul.addr %s408, 8
          %s410 = scalar_lea.hbm %s4, %s409
          %s412 = sshll.u32 %s402, 4
          %s413 = int_to_ptr.vmem [resolvable:$true] %s412
          %s414 = sshll.u32 %s410, 4
          %s415 = int_to_ptr.hbm [resolvable:$true] %s414
          %417 = dma.vmem_to_hbm [thread:$0]  %s413, 128, %s415, %s399
        $region40: #{tpu_custom_call.1} parent=35 // pred_fallthru
          _
      $region36: #{tpu_custom_call.1} parent=5 // pred_fallthru
        _
      %p418 = scmp.le.s32.totalorder 2, %s13
      // Predicated region
      $region41: #{tpu_custom_call.1} parent=5 // pred_check
        %p419 = pneg %p418
      $region42: #{tpu_custom_call.1} parent=5 // pred_check_branch
        %421 = sbr.rel (%p419) target = $region44
      $region43: #{tpu_custom_call.1} parent=5 // pred_region
        %s422 = ssub.s32 %s13, 2
        // Predicated region
        $region45: #{tpu_custom_call.1} parent=43 // pred_check
          %p423 = pneg %p156
        $region46: #{tpu_custom_call.1} parent=43 // pred_check_branch
          %425 = sbr.rel (%p423) target = $region48
        $region47: #{tpu_custom_call.1} parent=43 // pred_region
          %s426 = sand.u32 %s141, 1
          %s427 = scalar_lea.sflag [#allocation3], %s426
          %s428 = sand.u32 %s141, 1
          %s429 = smul.addr %s428, 8
          %s430 = scalar_lea.vmem [#allocation2], %s429
          %432 = dma.done %s427, 128
        $region48: #{tpu_custom_call.1} parent=43 // pred_fallthru
          _
      $region44: #{tpu_custom_call.1} parent=5 // pred_fallthru
        _
    $region6: #{tpu_custom_call.1} parent=1 // loop_footer
      %s17 = sadd.s32 1, %s13
    $region7: #{tpu_custom_call.1} parent=1 // loop_footer_branch
      %12 = sbr.rel target = $region3
    $region8: #{tpu_custom_call.1} parent=1 // loop_exit
      _
    %433 = vsyncpa [#allocation3], 1
    %s434 = scalar_lea.sflag [#allocation3], 1
    %435 = vsyncpa %s434, 1

</llo_original>
